<compile_context>
chip_gen: v5e
topology: v5e:2x2
jax: 0.10.0
libtpu: 0.0.40
codegen_flags: <defaults>
</compile_context>

<pallas_src>
import jax
import jax.numpy as jnp
from jax import lax
from jax.experimental import pallas as pl
from jax.experimental.pallas import tpu as pltpu


def _round_up(x, m):
    return ((x + m - 1) // m) * m


def _round_down(x, m):
    return (x // m) * m


def _cdiv(a, b):
    return -(-a // b)


def _vmem_budget_bytes(frac=0.8):
    """~80% of the per-core VMEM capacity (leaves headroom for compiler
    scratch / pipeline buffers).  Falls back to the smallest generation (v7x,
    64 MiB) if the query is unavailable."""
    cap = 64 * 1024 * 1024
    try:
        info = pltpu.get_tpu_info()
        cap = int(getattr(info, "vmem_capacity_bytes", cap) or cap)
    except Exception:
        pass
    return int(cap * frac)


# ---------------------------------------------------------------------------
# Kernels
# ---------------------------------------------------------------------------
def _distmult_kernel(sub_ref, rel_ref, ob_ref, out_ref):
    """Single-K-block kernel.  grid = (node tiles [parallel], row tiles).

    The DistMult gate sub*rel is recomputed per node tile: it is a tiny VPU
    multiply hidden under the MXU/DMA, and recomputing it (instead of carrying
    a scratch across the node axis) keeps the node axis free of carried state
    so it can be megacore-parallel."""
    sr = (sub_ref[...] * rel_ref[...]).astype(ob_ref.dtype)
    # (tm, K) x (tn, K) -> (tm, tn): contract the lane (embedding) axis of both
    # operands on the MXU with f32 accumulation; write the tile directly.
    out_ref[...] = lax.dot_general(
        sr,
        ob_ref[...],
        dimension_numbers=(((1,), (1,)), ((), ())),
        preferred_element_type=jnp.float32,
    ).astype(out_ref.dtype)


def _distmult_kernel_ksplit(sub_ref, rel_ref, ob_ref, out_ref, acc_ref):
    """Fallback split-K kernel (only for embedding dims too large for a single
    VMEM block).  grid = (node tiles, row tiles, K tiles)."""
    k = pl.program_id(2)

    @pl.when(k == 0)
    def _():
        acc_ref[...] = jnp.zeros_like(acc_ref)

    sr = (sub_ref[...] * rel_ref[...]).astype(ob_ref.dtype)
    acc_ref[...] += lax.dot_general(
        sr,
        ob_ref[...],
        dimension_numbers=(((1,), (1,)), ((), ())),
        preferred_element_type=jnp.float32,
    )

    @pl.when(k == pl.num_programs(2) - 1)
    def _():
        out_ref[...] = acc_ref[...].astype(out_ref.dtype)


# ---------------------------------------------------------------------------
# Wrapper
# ---------------------------------------------------------------------------
def make_distmult_scorer(ob, *, tn=512, matmul_dtype=None, out_dtype=None,
                         vmem_frac=0.8):
    """Prepare (pad + optionally cast) the node table once and return a
    `score(sub, rel) -> [num_triples, num_nodes]` callable.

    matmul_dtype: dtype of the MXU operands (e.g. jnp.bfloat16 halves the ob
      HBM stream; accumulation stays f32).  None keeps the input dtype.
    out_dtype: dtype of the returned scores (e.g. jnp.bfloat16 halves the
      score write).  None keeps the input dtype.
    """
    N, K = ob.shape
    in_dtype = jnp.dtype(ob.dtype)
    op_dtype = jnp.dtype(in_dtype if matmul_dtype is None else matmul_dtype)
    res_dtype = jnp.dtype(in_dtype if out_dtype is None else out_dtype)
    in_b = in_dtype.itemsize
    op_b = op_dtype.itemsize
    out_b = res_dtype.itemsize

    budget = _vmem_budget_bytes(vmem_frac)

    # ---- tile plan (M-independent part) -----------------------------------
    k_pad = _round_up(K, 128)
    tn_eff = min(_round_up(tn, 128), _round_up(N, 128))
    n_pad = _round_up(N, tn_eff)

    # Single-K feasibility: largest row tile that fits with the whole
    # contraction resident (double-buffered sub/rel/ob/out tiles).
    fixed = 2 * tn_eff * k_pad * op_b                       # ob tile
    per_tm = 2 * (2 * k_pad * in_b) + 2 * tn_eff * out_b    # sub+rel+out per row
    tm_cap = _round_down(max((budget - fixed) // per_tm, 0), 8)
    single_k = tm_cap >= 128

    if single_k:
        blk_k = k_pad
    else:
        # Rare fallback for very large embedding dims: split the contraction.
        tm_cap = 512
        fixed2 = 2 * tm_cap * tn_eff * out_b + tm_cap * tn_eff * 4  # out + acc
        per_k = 2 * (2 * tm_cap * in_b + tn_eff * op_b)
        blk_k = _round_down(max((budget - fixed2) // per_k, 128), 128)
        blk_k = max(min(blk_k, k_pad), 128)
        k_pad = _round_up(k_pad, blk_k)

    # ---- prepare ob once (cast + zero pad; reused across score() calls) ----
    ob_p = ob.astype(op_dtype)
    if (n_pad, k_pad) != (N, K):
        ob_p = jnp.pad(ob_p, ((0, n_pad - N), (0, k_pad - K)))
    nj = n_pad // tn_eff

    def score(sub, rel):
        M, K_in = sub.shape
        assert K_in == K and rel.shape == (M, K_in), (sub.shape, rel.shape)

        # Row tile: as large as the budget allows (whole M when it fits), then
        # balanced across the resulting number of row tiles to minimize padding.
        m_rounded = _round_up(M, 8)
        tm_eff = min(m_rounded, tm_cap)
        nri = _cdiv(m_rounded, tm_eff)
        tm_eff = _round_up(_cdiv(m_rounded, nri), 8)
        m_pad = nri * tm_eff

        def pad2(x):
            pr, pc = m_pad - x.shape[0], k_pad - x.shape[1]
            return jnp.pad(x, ((0, pr), (0, pc))) if (pr or pc) else x

        sub_p = pad2(sub)
        rel_p = pad2(rel)

        if single_k:
            grid = (nj, nri)
            kernel = _distmult_kernel
            in_specs = [
                pl.BlockSpec((tm_eff, blk_k), lambda j, i: (i, 0)),   # sub
                pl.BlockSpec((tm_eff, blk_k), lambda j, i: (i, 0)),   # rel
                pl.BlockSpec((tn_eff, blk_k), lambda j, i: (j, 0)),   # ob (i-invariant)
            ]
            out_specs = pl.BlockSpec((tm_eff, tn_eff), lambda j, i: (i, j))
            scratch_shapes = []
            # Node axis leads and is "parallel" (v7x megacore splits N, so ob
            # is streamed once in total); row axis is the inner sequential axis.
            dims = ("parallel", "arbitrary")
        else:
            grid = (nj, nri, k_pad // blk_k)
            kernel = _distmult_kernel_ksplit
            in_specs = [
                pl.BlockSpec((tm_eff, blk_k), lambda j, i, k: (i, k)),
                pl.BlockSpec((tm_eff, blk_k), lambda j, i, k: (i, k)),
                pl.BlockSpec((tn_eff, blk_k), lambda j, i, k: (j, k)),
            ]
            out_specs = pl.BlockSpec((tm_eff, tn_eff), lambda j, i, k: (i, j))
            scratch_shapes = [pltpu.VMEM((tm_eff, tn_eff), jnp.float32)]
            dims = ("parallel", "arbitrary", "arbitrary")

        out_p = pl.pallas_call(
            kernel,
            out_shape=jax.ShapeDtypeStruct((m_pad, n_pad), res_dtype),
            grid_spec=pltpu.PrefetchScalarGridSpec(
                num_scalar_prefetch=0,
                grid=grid,
                in_specs=in_specs,
                out_specs=out_specs,
                scratch_shapes=scratch_shapes,
            ),
            compiler_params=pltpu.CompilerParams(
                dimension_semantics=dims,
                vmem_limit_bytes=budget,
            ),
        )(sub_p, rel_p, ob_p)

        if (m_pad, n_pad) != (M, N):
            out_p = out_p[:M, :N]
        return out_p

    return score


def distmult(sub, rel, ob, **kwargs):
    """One-shot convenience wrapper: scores[t, n] = sum_d sub[t,d]*rel[t,d]*ob[n,d]."""
    return make_distmult_scorer(ob, **kwargs)(sub, rel)


if __name__ == "__main__":
    # DistMult has no learnable parameters; build deterministic embedding-like
    # inputs consistent with forward(sub, rel, ob).  Deliberately non-aligned
    # shapes to exercise the padding path.
    num_triples, num_nodes, embd_dim = 20, 300, 96
    key = jax.random.PRNGKey(0)
    k1, k2, k3, k4, k5 = jax.random.split(key, 5)
    sub = jax.random.normal(k1, (num_triples, embd_dim), dtype=jnp.float32)
    rel = jax.random.normal(k2, (num_triples, embd_dim), dtype=jnp.float32)
    ob = jax.random.normal(k3, (num_nodes, embd_dim), dtype=jnp.float32)

    # Exact (f32-operand, f32-output) path -- matches torch.mm(sub*rel, ob.T).
    scores = distmult(sub, rel, ob)
    jax.block_until_ready(scores)
    ref = jnp.dot(sub * rel, ob.T, precision=lax.Precision.HIGHEST)
    assert scores.shape == (num_triples, num_nodes)
    assert jnp.allclose(scores, ref, atol=5e-3, rtol=5e-3), \
        float(jnp.max(jnp.abs(scores - ref)))

    # Reusable scorer: ob padded/cast to bf16 once, reused across calls
    # (bf16 MXU operands + bf16 scores, f32 accumulation on the MXU).
    scorer = make_distmult_scorer(ob, matmul_dtype=jnp.bfloat16,
                                  out_dtype=jnp.bfloat16)
    sub2 = jax.random.normal(k4, (num_triples, embd_dim), dtype=jnp.float32)
    rel2 = jax.random.normal(k5, (num_triples, embd_dim), dtype=jnp.float32)
    for s, r in ((sub, rel), (sub2, rel2)):
        out = scorer(s, r)
        jax.block_until_ready(out)
        assert out.shape == (num_triples, num_nodes) and out.dtype == jnp.bfloat16
        ref_b = jnp.dot((s * r).astype(jnp.bfloat16).astype(jnp.float32),
                        ob.astype(jnp.bfloat16).astype(jnp.float32).T,
                        precision=lax.Precision.HIGHEST)
        diff = jnp.abs(out.astype(jnp.float32) - ref_b)
        assert jnp.all(diff <= 5e-2 + 5e-2 * jnp.abs(ref_b)), float(jnp.max(diff))

    print("KERNEL_OK")
</pallas_src>

<mosaic_0001>
module attributes {stable_mosaic.version = 11 : i64} {
  func.func @_distmult_kernel(%arg0: i32, %arg1: i32, %arg2: memref<24x128xf32, #tpu.memory_space<vmem>>, %arg3: memref<24x128xf32, #tpu.memory_space<vmem>>, %arg4: memref<384x128xf32, #tpu.memory_space<vmem>>, %arg5: memref<24x384xf32, #tpu.memory_space<vmem>>) attributes {dimension_semantics = [#tpu.dimension_semantics<parallel>, #tpu.dimension_semantics<arbitrary>], iteration_bounds = array<i64: 1, 1>, scalar_prefetch = 0 : i64, scratch_operands = 0 : i64, tpu.core_type = #tpu.core_type<tc>, window_params = [{transform_indices = @transform_0, window_bounds = array<i64: 24, 128>}, {transform_indices = @transform_1, window_bounds = array<i64: 24, 128>}, {transform_indices = @transform_2, window_bounds = array<i64: 384, 128>}, {transform_indices = @transform_3, window_bounds = array<i64: 24, 384>}]} {
    %c0 = arith.constant 0 : index
    %c0_0 = arith.constant 0 : index
    %0 = vector.load %arg2[%c0, %c0_0] : memref<24x128xf32, #tpu.memory_space<vmem>>, vector<24x128xf32>
    %c0_1 = arith.constant 0 : index
    %c0_2 = arith.constant 0 : index
    %1 = vector.load %arg3[%c0_1, %c0_2] : memref<24x128xf32, #tpu.memory_space<vmem>>, vector<24x128xf32>
    %2 = arith.mulf %0, %1 : vector<24x128xf32>
    %c0_3 = arith.constant 0 : index
    %c0_4 = arith.constant 0 : index
    %3 = vector.load %arg4[%c0_3, %c0_4] : memref<384x128xf32, #tpu.memory_space<vmem>>, vector<384x128xf32>
    %cst = arith.constant dense<0.000000e+00> : vector<24x384xf32>
    %4 = tpu.matmul %2, %3, %cst {dimension_numbers = #tpu.dot_dimension_numbers<[1], [1], [0], [0], [0, 0, 1, 0], [], []>} : vector<24x128xf32>, vector<384x128xf32>, vector<24x384xf32> -> vector<24x384xf32>
    %c0_5 = arith.constant 0 : index
    %c0_6 = arith.constant 0 : index
    %5 = vector.load %arg5[%c0_5, %c0_6] : memref<24x384xf32, #tpu.memory_space<vmem>>, vector<24x384xf32>
    tpu.vector_store %arg5[%c0_5, %c0_6], %4 {strides = array<i32>} : memref<24x384xf32, #tpu.memory_space<vmem>>, vector<24x384xf32>,
    return
  }
  func.func @transform_0(%arg0: i32, %arg1: i32) -> (i32, i32) {
    %c0_i32 = arith.constant 0 : i32
    %c0_i32_0 = arith.constant 0 : i32
    return %arg1, %c0_i32 : i32, i32
  }
  func.func @transform_1(%arg0: i32, %arg1: i32) -> (i32, i32) {
    %c0_i32 = arith.constant 0 : i32
    %c0_i32_0 = arith.constant 0 : i32
    return %arg1, %c0_i32 : i32, i32
  }
  func.func @transform_2(%arg0: i32, %arg1: i32) -> (i32, i32) {
    %c0_i32 = arith.constant 0 : i32
    %c0_i32_0 = arith.constant 0 : i32
    return %arg0, %c0_i32 : i32, i32
  }
  func.func @transform_3(%arg0: i32, %arg1: i32) -> (i32, i32) {
    %c0_i32 = arith.constant 0 : i32
    return %arg1, %arg0 : i32, i32
  }
}

</mosaic_0001>

<llo_original>
// kernel: tpu_custom_call.1
$region0: #{tpu_custom_call.1}
  #allocation0 [shape = 'u32[]', space=smem, size = 0x4, offset = 0x4, fixed_abs, tag = 'smem constant byte address 0x4 - core index']
  #allocation1 [shape = 'u32[72,128]{1,0:T(1,128)}', space=vmem, size = 0x9000, scoped, tag = 'internal scratch']
  %s0 = inlined_call_operand.hbm [shape: f32[24,128], index: 0, kind: input, shape index: {}]
  %s1 = inlined_call_operand.hbm [shape: f32[24,128], index: 1, kind: input, shape index: {}]
  %s2 = inlined_call_operand.hbm [shape: f32[384,128], index: 2, kind: input, shape index: {}]
  %s3 = inlined_call_operand.hbm [shape: f32[24,384], index: 3, kind: output, shape index: {}]
  %s4 = sld [smem:[#allocation0]]
  $region34: #{tpu_custom_call.1} parent=0
    _
  %s6 = ssub.s32 1, %s4
  %s7 = scalar_select 0, %s6, %s4
  $region1: #{tpu_custom_call.1} parent=0
    #allocation2 [shape = 'u8[12288]{0}', space=vmem, size = 0x3000, scoped, tag = 'input window, operand 0, single buffered']
    #allocation3 [shape = 's32[1]{0}', space=sflag, size = 0x4, scoped, tag = 'scoped memory for tpu_custom_call.1']
    #allocation4 [shape = 's32[1]{0}', space=sflag, size = 0x4, scoped, tag = 'scoped memory for tpu_custom_call.1']
    #allocation5 [shape = 'u8[12288]{0}', space=vmem, size = 0x3000, scoped, tag = 'input window, operand 1, single buffered']
    #allocation6 [shape = 's32[1]{0}', space=sflag, size = 0x4, scoped, tag = 'scoped memory for tpu_custom_call.1']
    #allocation7 [shape = 'u8[196608]{0}', space=vmem, size = 0x30000, scoped, tag = 'input window, operand 2, single buffered']
    #allocation8 [shape = 'u8[36864]{0}', space=vmem, size = 0x9000, scoped, tag = 'output window, operand 0, single buffered']
    %8 = vsyncpa [#allocation3], 0
    %9 = vsyncpa [#allocation6], 0
    %10 = vsyncpa [#allocation4], 0
    // Predicated region
    $region2: #{tpu_custom_call.1} parent=1 // pred_check
      _
    $region3: #{tpu_custom_call.1} parent=1 // pred_check_branch
      %12 = sbr.rel (0) target = $region5
    $region4: #{tpu_custom_call.1} parent=1 // pred_region
      %14 = vsyncadd [#allocation3], 0
      %s15 = sshll.u32 %s0, 4
      %s16 = int_to_ptr.hbm [resolvable:$true] %s15
      %s17 = sshll.u32 [#allocation2], 4
      %s18 = int_to_ptr.vmem [resolvable:$true] %s17
      %23 = dma.hbm_to_vmem [thread:$0]  %s16, 384, %s18, [#allocation3], 128, 128, 8
    $region5: #{tpu_custom_call.1} parent=1 // pred_fallthru
      _
    // Predicated region
    $region6: #{tpu_custom_call.1} parent=1 // pred_check
      _
    $region7: #{tpu_custom_call.1} parent=1 // pred_check_branch
      %25 = sbr.rel (0) target = $region9
    $region8: #{tpu_custom_call.1} parent=1 // pred_region
      %27 = vsyncadd [#allocation6], 0
      %s28 = sshll.u32 %s1, 4
      %s29 = int_to_ptr.hbm [resolvable:$true] %s28
      %s30 = sshll.u32 [#allocation5], 4
      %s31 = int_to_ptr.vmem [resolvable:$true] %s30
      %36 = dma.hbm_to_vmem [thread:$0]  %s29, 384, %s31, [#allocation6], 128, 128, 8
    $region9: #{tpu_custom_call.1} parent=1 // pred_fallthru
      _
    // Predicated region
    $region10: #{tpu_custom_call.1} parent=1 // pred_check
      _
    $region11: #{tpu_custom_call.1} parent=1 // pred_check_branch
      %38 = sbr.rel (0) target = $region13
    $region12: #{tpu_custom_call.1} parent=1 // pred_region
      %40 = vsyncadd [#allocation6], 0
      %s41 = sshll.u32 %s2, 4
      %s42 = int_to_ptr.hbm [resolvable:$true] %s41
      %s43 = sshll.u32 [#allocation7], 4
      %s44 = int_to_ptr.vmem [resolvable:$true] %s43
      %49 = dma.hbm_to_vmem [thread:$0]  %s42, 6144, %s44, [#allocation6], 128, 128, 8
    $region13: #{tpu_custom_call.1} parent=1 // pred_fallthru
      _
    // Predicated region
    $region14: #{tpu_custom_call.1} parent=1 // pred_check
      _
    $region15: #{tpu_custom_call.1} parent=1 // pred_check_branch
      %51 = sbr.rel (0) target = $region17
    $region16: #{tpu_custom_call.1} parent=1 // pred_region
      %53 = dma.done [#allocation3], 384
    $region17: #{tpu_custom_call.1} parent=1 // pred_fallthru
      _
    // Predicated region
    $region18: #{tpu_custom_call.1} parent=1 // pred_check
      _
    $region19: #{tpu_custom_call.1} parent=1 // pred_check_branch
      %55 = sbr.rel (0) target = $region21
    $region20: #{tpu_custom_call.1} parent=1 // pred_region
      %57 = dma.done [#allocation6], 384
    $region21: #{tpu_custom_call.1} parent=1 // pred_fallthru
      _
    // Predicated region
    $region22: #{tpu_custom_call.1} parent=1 // pred_check
      _
    $region23: #{tpu_custom_call.1} parent=1 // pred_check_branch
      %59 = sbr.rel (0) target = $region25
    $region24: #{tpu_custom_call.1} parent=1 // pred_region
      %61 = dma.done [#allocation6], 6144
    $region25: #{tpu_custom_call.1} parent=1 // pred_fallthru
      _
    %v62 = vld [vmem:[#allocation2] sm:$0xff]
    %v63 = vld [vmem:[#allocation2 + $0x8] sm:$0xff]
    %v64 = vld [vmem:[#allocation2 + $0x10] sm:$0xff]
    %v65 = vld [vmem:[#allocation5] sm:$0xff]
    %v66 = vld [vmem:[#allocation5 + $0x8] sm:$0xff]
    %v67 = vld [vmem:[#allocation5 + $0x10] sm:$0xff]
    %v68 = vmul.f32 %v62, %v65
    %v69 = vmul.f32 %v63, %v66
    %v70 = vmul.f32 %v64, %v67
    %v71 = vld [vmem:[#allocation7] sm:$0xff]
    %v72 = vld [vmem:[#allocation7 + $0x8] sm:$0xff]
    %v73 = vld [vmem:[#allocation7 + $0x10] sm:$0xff]
    %v74 = vld [vmem:[#allocation7 + $0x18] sm:$0xff]
    %v75 = vld [vmem:[#allocation7 + $0x20] sm:$0xff]
    %v76 = vld [vmem:[#allocation7 + $0x28] sm:$0xff]
    %v77 = vld [vmem:[#allocation7 + $0x30] sm:$0xff]
    %v78 = vld [vmem:[#allocation7 + $0x38] sm:$0xff]
    %v79 = vld [vmem:[#allocation7 + $0x40] sm:$0xff]
    %v80 = vld [vmem:[#allocation7 + $0x48] sm:$0xff]
    %v81 = vld [vmem:[#allocation7 + $0x50] sm:$0xff]
    %v82 = vld [vmem:[#allocation7 + $0x58] sm:$0xff]
    %v83 = vld [vmem:[#allocation7 + $0x60] sm:$0xff]
    %v84 = vld [vmem:[#allocation7 + $0x68] sm:$0xff]
    %v85 = vld [vmem:[#allocation7 + $0x70] sm:$0xff]
    %v86 = vld [vmem:[#allocation7 + $0x78] sm:$0xff]
    %v87 = vld [vmem:[#allocation7 + $0x80] sm:$0xff]
    %v88 = vld [vmem:[#allocation7 + $0x88] sm:$0xff]
    %v89 = vld [vmem:[#allocation7 + $0x90] sm:$0xff]
    %v90 = vld [vmem:[#allocation7 + $0x98] sm:$0xff]
    %v91 = vld [vmem:[#allocation7 + $0xa0] sm:$0xff]
    %v92 = vld [vmem:[#allocation7 + $0xa8] sm:$0xff]
    %v93 = vld [vmem:[#allocation7 + $0xb0] sm:$0xff]
    %v94 = vld [vmem:[#allocation7 + $0xb8] sm:$0xff]
    %v95 = vld [vmem:[#allocation7 + $0xc0] sm:$0xff]
    %v96 = vld [vmem:[#allocation7 + $0xc8] sm:$0xff]
    %v97 = vld [vmem:[#allocation7 + $0xd0] sm:$0xff]
    %v98 = vld [vmem:[#allocation7 + $0xd8] sm:$0xff]
    %v99 = vld [vmem:[#allocation7 + $0xe0] sm:$0xff]
    %v100 = vld [vmem:[#allocation7 + $0xe8] sm:$0xff]
    %v101 = vld [vmem:[#allocation7 + $0xf0] sm:$0xff]
    %v102 = vld [vmem:[#allocation7 + $0xf8] sm:$0xff]
    %v103 = vld [vmem:[#allocation7 + $0x100] sm:$0xff]
    %v104 = vld [vmem:[#allocation7 + $0x108] sm:$0xff]
    %v105 = vld [vmem:[#allocation7 + $0x110] sm:$0xff]
    %v106 = vld [vmem:[#allocation7 + $0x118] sm:$0xff]
    %v107 = vld [vmem:[#allocation7 + $0x120] sm:$0xff]
    %v108 = vld [vmem:[#allocation7 + $0x128] sm:$0xff]
    %v109 = vld [vmem:[#allocation7 + $0x130] sm:$0xff]
    %v110 = vld [vmem:[#allocation7 + $0x138] sm:$0xff]
    %v111 = vld [vmem:[#allocation7 + $0x140] sm:$0xff]
    %v112 = vld [vmem:[#allocation7 + $0x148] sm:$0xff]
    %v113 = vld [vmem:[#allocation7 + $0x150] sm:$0xff]
    %v114 = vld [vmem:[#allocation7 + $0x158] sm:$0xff]
    %v115 = vld [vmem:[#allocation7 + $0x160] sm:$0xff]
    %v116 = vld [vmem:[#allocation7 + $0x168] sm:$0xff]
    %v117 = vld [vmem:[#allocation7 + $0x170] sm:$0xff]
    %v118 = vld [vmem:[#allocation7 + $0x178] sm:$0xff]
    %119 = vmatpush.xpose.msra.mxu0 %v86
    %120 = vmatpush.xpose.msra.mxu0 %v85
    %121 = vmatpush.xpose.msra.mxu0 %v84
    %122 = vmatpush.xpose.msra.mxu0 %v83
    %123 = vmatpush.xpose.msra.mxu0 %v82
    %124 = vmatpush.xpose.msra.mxu0 %v81
    %125 = vmatpush.xpose.msra.mxu0 %v80
    %126 = vmatpush.xpose.msra.mxu0 %v79
    %127 = vmatpush.xpose.msra.mxu0 %v78
    %128 = vmatpush.xpose.msra.mxu0 %v77
    %129 = vmatpush.xpose.msra.mxu0 %v76
    %130 = vmatpush.xpose.msra.mxu0 %v75
    %131 = vmatpush.xpose.msra.mxu0 %v74
    %132 = vmatpush.xpose.msra.mxu0 %v73
    %133 = vmatpush.xpose.msra.mxu0 %v72
    %134 = vmatpush.xpose.msra.mxu0 %v71
    %135 = vmatmul.f32.gmra.mxu0 %v68
    %v136 = vpop.f32.mrf.mxu0
    %v137 = vadd.f32 0.0, %v136
    %138 = vmatmul.f32.gmra.mxu0 %v69
    %v139 = vpop.f32.mrf.mxu0
    %v140 = vadd.f32 0.0, %v139
    %141 = vmatmul.f32.gmra.mxu0 %v70
    %v142 = vpop.f32.mrf.mxu0
    %v143 = vadd.f32 0.0, %v142
    %144 = vdwg.mxu0
    %145 = vmatpush.xpose.msra.mxu0 %v102
    %146 = vmatpush.xpose.msra.mxu0 %v101
    %147 = vmatpush.xpose.msra.mxu0 %v100
    %148 = vmatpush.xpose.msra.mxu0 %v99
    %149 = vmatpush.xpose.msra.mxu0 %v98
    %150 = vmatpush.xpose.msra.mxu0 %v97
    %151 = vmatpush.xpose.msra.mxu0 %v96
    %152 = vmatpush.xpose.msra.mxu0 %v95
    %153 = vmatpush.xpose.msra.mxu0 %v94
    %154 = vmatpush.xpose.msra.mxu0 %v93
    %155 = vmatpush.xpose.msra.mxu0 %v92
    %156 = vmatpush.xpose.msra.mxu0 %v91
    %157 = vmatpush.xpose.msra.mxu0 %v90
    %158 = vmatpush.xpose.msra.mxu0 %v89
    %159 = vmatpush.xpose.msra.mxu0 %v88
    %160 = vmatpush.xpose.msra.mxu0 %v87
    %161 = vmatmul.f32.gmra.mxu0 %v68
    %v162 = vpop.f32.mrf.mxu0
    %v163 = vadd.f32 0.0, %v162
    %164 = vmatmul.f32.gmra.mxu0 %v69
    %v165 = vpop.f32.mrf.mxu0
    %v166 = vadd.f32 0.0, %v165
    %167 = vmatmul.f32.gmra.mxu0 %v70
    %v168 = vpop.f32.mrf.mxu0
    %v169 = vadd.f32 0.0, %v168
    %170 = vdwg.mxu0
    %171 = vmatpush.xpose.msra.mxu0 %v118
    %172 = vmatpush.xpose.msra.mxu0 %v117
    %173 = vmatpush.xpose.msra.mxu0 %v116
    %174 = vmatpush.xpose.msra.mxu0 %v115
    %175 = vmatpush.xpose.msra.mxu0 %v114
    %176 = vmatpush.xpose.msra.mxu0 %v113
    %177 = vmatpush.xpose.msra.mxu0 %v112
    %178 = vmatpush.xpose.msra.mxu0 %v111
    %179 = vmatpush.xpose.msra.mxu0 %v110
    %180 = vmatpush.xpose.msra.mxu0 %v109
    %181 = vmatpush.xpose.msra.mxu0 %v108
    %182 = vmatpush.xpose.msra.mxu0 %v107
    %183 = vmatpush.xpose.msra.mxu0 %v106
    %184 = vmatpush.xpose.msra.mxu0 %v105
    %185 = vmatpush.xpose.msra.mxu0 %v104
    %186 = vmatpush.xpose.msra.mxu0 %v103
    %187 = vmatmul.f32.gmra.mxu0 %v68
    %v188 = vpop.f32.mrf.mxu0
    %v189 = vadd.f32 0.0, %v188
    %190 = vmatmul.f32.gmra.mxu0 %v69
    %v191 = vpop.f32.mrf.mxu0
    %v192 = vadd.f32 0.0, %v191
    %193 = vmatmul.f32.gmra.mxu0 %v70
    %v194 = vpop.f32.mrf.mxu0
    %v195 = vadd.f32 0.0, %v194
    %196 = vdwg.mxu0
    %197 = vst [vmem:[#allocation8] sm:$0xff] %v137
    %198 = vst [vmem:[#allocation8 + $0x8] sm:$0xff] %v163
    %199 = vst [vmem:[#allocation8 + $0x10] sm:$0xff] %v189
    %200 = vst [vmem:[#allocation8 + $0x18] sm:$0xff] %v140
    %201 = vst [vmem:[#allocation8 + $0x20] sm:$0xff] %v166
    %202 = vst [vmem:[#allocation8 + $0x28] sm:$0xff] %v192
    %203 = vst [vmem:[#allocation8 + $0x30] sm:$0xff] %v143
    %204 = vst [vmem:[#allocation8 + $0x38] sm:$0xff] %v169
    %205 = vst [vmem:[#allocation8 + $0x40] sm:$0xff] %v195
    // Predicated region
    $region26: #{tpu_custom_call.1} parent=1 // pred_check
      _
    $region27: #{tpu_custom_call.1} parent=1 // pred_check_branch
      %207 = sbr.rel (0) target = $region29
    $region28: #{tpu_custom_call.1} parent=1 // pred_region
      %209 = vsyncadd [#allocation4], 0
      %s210 = sshll.u32 [#allocation8], 4
      %s211 = int_to_ptr.vmem [resolvable:$true] %s210
      %s212 = sshll.u32 %s3, 4
      %s213 = int_to_ptr.hbm [resolvable:$true] %s212
      %218 = dma.vmem_to_hbm [thread:$0]  %s211, 1152, %s213, [#allocation4], 384, 384, 24
    $region29: #{tpu_custom_call.1} parent=1 // pred_fallthru
      _
    // Predicated region
    $region30: #{tpu_custom_call.1} parent=1 // pred_check
      _
    $region31: #{tpu_custom_call.1} parent=1 // pred_check_branch
      %220 = sbr.rel (0) target = $region33
    $region32: #{tpu_custom_call.1} parent=1 // pred_region
      %222 = dma.done [#allocation4], 1152
    $region33: #{tpu_custom_call.1} parent=1 // pred_fallthru
      _
    %223 = vsyncpa [#allocation3], 1
    %224 = vsyncpa [#allocation6], 1
    %225 = vsyncpa [#allocation4], 1

</llo_original>
